<compile_context>
chip_gen: v7x
topology: tpu7x:2x2x1
jax: 0.10.0
libtpu: 0.0.40
codegen_flags: <defaults>
</compile_context>

<pallas_src>
import functools

import jax
import jax.numpy as jnp
from jax.experimental import pallas as pl
from jax.experimental.pallas import tpu as pltpu


_LANE = 128
_SUBLANE = 8
_VMEM_LIMIT_BYTES = 48 * 1024 * 1024   # fits v5e/v6e (128 MiB) and v7x (64 MiB)
_STATS_BLOCK_BYTES = 8 * 1024 * 1024   # stats pass: only 2x input buffers resident
_APPLY_BLOCK_BYTES = 4 * 1024 * 1024   # apply pass: 2x input + 2x output buffers
_LANE_TILE_CAP = 4096                  # keeps the unrolled chunk loop <= 32


def _round_up(x, m):
    return -(-x // m) * m


def _pick_tiles(nc, hw, itemsize, block_bytes):
    """(8,128)-aligned (r_tile, hw_tile) with r_tile*hw_tile*itemsize ~<= block_bytes."""
    hw_tile = min(_round_up(hw, _LANE), _LANE_TILE_CAP)
    nc_pad = _round_up(nc, _SUBLANE)
    r_tile = (block_bytes // (hw_tile * itemsize)) // _SUBLANE * _SUBLANE
    r_tile = max(_SUBLANE, min(r_tile, nc_pad))
    # Keep >= 2 row blocks when possible so v7x megacore can shard the
    # "parallel" row axis across both TensorCores.
    if nc_pad >= 2 * _SUBLANE:
        half = _round_up(-(-nc_pad // 2), _SUBLANE)
        r_tile = min(r_tile, half)
    return r_tile, hw_tile


# ---------------------------------------------------------------------------
# Kernels
# ---------------------------------------------------------------------------

def _bn_stats_kernel(x_ref, sum_ref, sumsq_ref, *, hw, hw_tile, mask_lanes):
    """Per-row lane-dense (r_tile, 128) partial sum / sum-of-squares.

    Accumulates across the lane-tiled reduction axis (grid axis 1) into
    resident f32 accumulators; the 128-lane reduce happens in the wrapper.
    """
    j = pl.program_id(1)  # reduction axis (innermost, "arbitrary")

    @pl.when(j == 0)
    def _():
        sum_ref[...] = jnp.zeros_like(sum_ref)
        sumsq_ref[...] = jnp.zeros_like(sumsq_ref)

    x = x_ref[...].astype(jnp.float32)
    if mask_lanes:
        # Zero out lanes past the true HW extent (padding from the cdiv grid).
        lane = jax.lax.broadcasted_iota(jnp.int32, x.shape, 1) + j * hw_tile
        x = jnp.where(lane < hw, x, 0.0)

    nchunks = hw_tile // _LANE
    s = jnp.zeros(sum_ref.shape, jnp.float32)
    ss = jnp.zeros(sumsq_ref.shape, jnp.float32)
    for t in range(nchunks):  # static, unrolled; aligned 128-lane slices -> pure VPU
        c = x[:, t * _LANE:(t + 1) * _LANE]
        s = s + c
        ss = ss + c * c
    sum_ref[...] += s
    sumsq_ref[...] += ss


def _bn_apply_kernel(x_ref, ab_ref, o_ref):
    """y = x * a + b with per-row constants packed as ab[:, 0]=a, ab[:, 1]=b."""
    x = x_ref[...].astype(jnp.float32)
    ab = ab_ref[...]
    a = ab[:, 0:1]
    b = ab[:, 1:2]
    o_ref[...] = (x * a + b).astype(o_ref.dtype)


# ---------------------------------------------------------------------------
# Wrapper
# ---------------------------------------------------------------------------

def batch_norm2d(x_nchw, scale, beta, train_test_flag, *, eps=0.001):
    """BatchNorm2d forward. x_nchw: [N, C, H, W]; scale/beta: [C].

    train_test_flag must be a static Python number (selects between two
    kernel programs; do not pass a traced value).
    """
    training = float(train_test_flag) <= 0.5

    N, C, H, W = x_nchw.shape
    HW = H * W
    NC = N * C
    M = N * HW  # per-channel reduction size
    itemsize = jnp.dtype(x_nchw.dtype).itemsize

    # Free reshape: row n*C + c <-> (batch n, channel c); no data movement.
    x2 = x_nchw.reshape(NC, HW)

    if training:
        # ---------------- pass 1: per-row lane-dense partial stats ----------
        r_tile, hw_tile = _pick_tiles(NC, HW, itemsize, _STATS_BLOCK_BYTES)
        grid = (-(-NC // r_tile), -(-HW // hw_tile))
        mask_lanes = (HW % hw_tile) != 0

        stats_kernel = functools.partial(
            _bn_stats_kernel, hw=HW, hw_tile=hw_tile, mask_lanes=mask_lanes)

        row_sum, row_sumsq = pl.pallas_call(
            stats_kernel,
            out_shape=(
                jax.ShapeDtypeStruct((NC, _LANE), jnp.float32),
                jax.ShapeDtypeStruct((NC, _LANE), jnp.float32),
            ),
            grid_spec=pl.GridSpec(
                grid=grid,
                in_specs=[
                    pl.BlockSpec((r_tile, hw_tile), lambda i, j: (i, j)),
                ],
                out_specs=(
                    pl.BlockSpec((r_tile, _LANE), lambda i, j: (i, 0)),
                    pl.BlockSpec((r_tile, _LANE), lambda i, j: (i, 0)),
                ),
            ),
            compiler_params=pltpu.CompilerParams(
                dimension_semantics=("parallel", "arbitrary"),
                vmem_limit_bytes=_VMEM_LIMIT_BYTES,
            ),
            cost_estimate=pl.CostEstimate(
                flops=3 * NC * HW,
                transcendentals=0,
                bytes_accessed=NC * HW * itemsize + 2 * NC * _LANE * 4,
            ),
        )(x2)

        # -------- fold per-channel constants (tiny (NC,128) math) ----------
        ch_sum = jnp.sum(row_sum.reshape(N, C, _LANE), axis=(0, 2))
        ch_sumsq = jnp.sum(row_sumsq.reshape(N, C, _LANE), axis=(0, 2))
        mean = ch_sum / jnp.float32(M)
        # TODO(synk): E[x^2]-mean^2 in f32 can lose precision for |mean|>>std;
        # a shifted two-pass variance would be exact but needs another x pass.
        var = jnp.maximum(ch_sumsq / jnp.float32(M) - mean * mean, 0.0)  # biased
        a = scale.astype(jnp.float32) * jax.lax.rsqrt(var + jnp.float32(eps))
        b = beta.astype(jnp.float32) - mean * a
    else:
        # pop_mean = 0, pop_var = 1  ->  a = scale / sqrt(1 + eps), b = beta
        a = scale.astype(jnp.float32) * jax.lax.rsqrt(jnp.float32(1.0 + eps))
        b = beta.astype(jnp.float32)

    # Per-(batch, channel) row constants packed into one (NC, 2) side input.
    ab = jnp.stack([jnp.tile(a, (N,)), jnp.tile(b, (N,))], axis=-1)  # f32 (NC, 2)

    # ---------------- pass 2 (or eval-only pass): y = x * a + b -------------
    r_tile, hw_tile = _pick_tiles(NC, HW, itemsize, _APPLY_BLOCK_BYTES)
    grid = (-(-NC // r_tile), -(-HW // hw_tile))

    out2 = pl.pallas_call(
        _bn_apply_kernel,
        out_shape=jax.ShapeDtypeStruct((NC, HW), x_nchw.dtype),
        grid_spec=pl.GridSpec(
            grid=grid,
            in_specs=[
                pl.BlockSpec((r_tile, hw_tile), lambda i, j: (i, j)),
                pl.BlockSpec((r_tile, 2), lambda i, j: (i, 0)),
            ],
            out_specs=pl.BlockSpec((r_tile, hw_tile), lambda i, j: (i, j)),
        ),
        compiler_params=pltpu.CompilerParams(
            dimension_semantics=("parallel", "parallel"),
            vmem_limit_bytes=_VMEM_LIMIT_BYTES,
        ),
        cost_estimate=pl.CostEstimate(
            flops=2 * NC * HW,
            transcendentals=0,
            bytes_accessed=2 * NC * HW * itemsize + NC * 2 * 4,
        ),
    )(x2, ab)

    return out2.reshape(N, C, H, W)


# TODO(synk): running-stat (pop_mean/pop_var, `decay`) momentum update is not
# implemented; the PyTorch module recreates and discards those tensors every
# forward, so there is no observable state to update.


# ---------------------------------------------------------------------------
# Reference + test
# ---------------------------------------------------------------------------

def _reference(x, scale, beta, train_test_flag, eps=0.001):
    s = scale.reshape(1, -1, 1, 1)
    b = beta.reshape(1, -1, 1, 1)
    if train_test_flag <= 0.5:
        mean = jnp.mean(x, axis=(0, 2, 3), keepdims=True)
        var = jnp.mean((x - mean) ** 2, axis=(0, 2, 3), keepdims=True)
        return s * (x - mean) / jnp.sqrt(var + eps) + b
    else:
        return s * x / jnp.sqrt(1.0 + eps) + b


if __name__ == "__main__":
    gamma_init, beta_init = 1.5, -0.25

    def _check(shape):
        N, C, H, W = shape
        x = jax.random.normal(jax.random.PRNGKey(0), (N, C, H, W), dtype=jnp.float32)
        scale = gamma_init * jnp.ones((C,), dtype=jnp.float32)
        beta = beta_init * jnp.ones((C,), dtype=jnp.float32)

        out_train = jax.block_until_ready(batch_norm2d(x, scale, beta, 0.0))
        out_eval = jax.block_until_ready(batch_norm2d(x, scale, beta, 1.0))

        ref_train = _reference(x, scale, beta, 0.0)
        ref_eval = _reference(x, scale, beta, 1.0)
        assert jnp.allclose(out_train, ref_train, atol=1e-4, rtol=1e-4), shape
        assert jnp.allclose(out_eval, ref_eval, atol=1e-4, rtol=1e-4), shape

    # Aligned shape (NC % 8 == 0, HW % 128 == 0), matching the module's small case.
    _check((2, 4, 16, 16))
    # Unaligned shape exercises the cdiv grid + lane masking + partial row block.
    _check((2, 3, 5, 7))

    print("KERNEL_OK")
</pallas_src>

<mosaic_0001>
module attributes {stable_mosaic.version = 11 : i64} {
  func.func @_bn_stats_kernel(%arg0: i32, %arg1: i32, %arg2: memref<8x256xf32, #tpu.memory_space<vmem>>, %arg3: memref<8x128xf32, #tpu.memory_space<vmem>>, %arg4: memref<8x128xf32, #tpu.memory_space<vmem>>) attributes {dimension_semantics = [#tpu.dimension_semantics<parallel>, #tpu.dimension_semantics<arbitrary>], iteration_bounds = array<i64: 1, 1>, scalar_prefetch = 0 : i64, scratch_operands = 0 : i64, tpu.core_type = #tpu.core_type<tc>, window_params = [{transform_indices = @transform_0, window_bounds = array<i64: 8, 256>}, {transform_indices = @transform_1, window_bounds = array<i64: 8, 128>}, {transform_indices = @transform_2, window_bounds = array<i64: 8, 128>}]} {
    %c0_i32 = arith.constant 0 : i32
    %0 = arith.cmpi eq, %arg1, %c0_i32 : i32
    %1 = arith.extui %0 : i1 to i32
    %c0_i32_0 = arith.constant 0 : i32
    %2 = arith.cmpi ne, %1, %c0_i32_0 : i32
    scf.if %2 {
      %cst_11 = arith.constant 0.000000e+00 : f32
      %20 = vector.broadcast %cst_11 : f32 to vector<8x128xf32>
      %c0_12 = arith.constant 0 : index
      %c0_13 = arith.constant 0 : index
      %21 = vector.load %arg3[%c0_12, %c0_13] : memref<8x128xf32, #tpu.memory_space<vmem>>, vector<8x128xf32>
      tpu.vector_store %arg3[%c0_12, %c0_13], %20 {strides = array<i32>} : memref<8x128xf32, #tpu.memory_space<vmem>>, vector<8x128xf32>,
      %cst_14 = arith.constant 0.000000e+00 : f32
      %22 = vector.broadcast %cst_14 : f32 to vector<8x128xf32>
      %c0_15 = arith.constant 0 : index
      %c0_16 = arith.constant 0 : index
      %23 = vector.load %arg4[%c0_15, %c0_16] : memref<8x128xf32, #tpu.memory_space<vmem>>, vector<8x128xf32>
      tpu.vector_store %arg4[%c0_15, %c0_16], %22 {strides = array<i32>} : memref<8x128xf32, #tpu.memory_space<vmem>>, vector<8x128xf32>,
    } else {
    }
    %c0 = arith.constant 0 : index
    %c0_1 = arith.constant 0 : index
    %3 = vector.load %arg2[%c0, %c0_1] : memref<8x256xf32, #tpu.memory_space<vmem>>, vector<8x256xf32>
    %cst = arith.constant 0.000000e+00 : f32
    %4 = vector.broadcast %cst : f32 to vector<8x128xf32>
    %cst_2 = arith.constant 0.000000e+00 : f32
    %5 = vector.broadcast %cst_2 : f32 to vector<8x128xf32>
    %6 = vector.extract_strided_slice %3 {offsets = [0, 0], sizes = [8, 128], strides = [1, 1]} : vector<8x256xf32> to vector<8x128xf32>
    %7 = arith.addf %4, %6 : vector<8x128xf32>
    %8 = arith.mulf %6, %6 : vector<8x128xf32>
    %9 = arith.addf %5, %8 : vector<8x128xf32>
    %10 = vector.extract_strided_slice %3 {offsets = [0, 128], sizes = [8, 128], strides = [1, 1]} : vector<8x256xf32> to vector<8x128xf32>
    %11 = arith.addf %7, %10 : vector<8x128xf32>
    %12 = arith.mulf %10, %10 : vector<8x128xf32>
    %13 = arith.addf %9, %12 : vector<8x128xf32>
    %c0_3 = arith.constant 0 : index
    %c0_4 = arith.constant 0 : index
    %14 = vector.load %arg3[%c0_3, %c0_4] : memref<8x128xf32, #tpu.memory_space<vmem>>, vector<8x128xf32>
    %15 = arith.addf %14, %11 : vector<8x128xf32>
    %c0_5 = arith.constant 0 : index
    %c0_6 = arith.constant 0 : index
    %16 = vector.load %arg3[%c0_5, %c0_6] : memref<8x128xf32, #tpu.memory_space<vmem>>, vector<8x128xf32>
    tpu.vector_store %arg3[%c0_5, %c0_6], %15 {strides = array<i32>} : memref<8x128xf32, #tpu.memory_space<vmem>>, vector<8x128xf32>,
    %c0_7 = arith.constant 0 : index
    %c0_8 = arith.constant 0 : index
    %17 = vector.load %arg4[%c0_7, %c0_8] : memref<8x128xf32, #tpu.memory_space<vmem>>, vector<8x128xf32>
    %18 = arith.addf %17, %13 : vector<8x128xf32>
    %c0_9 = arith.constant 0 : index
    %c0_10 = arith.constant 0 : index
    %19 = vector.load %arg4[%c0_9, %c0_10] : memref<8x128xf32, #tpu.memory_space<vmem>>, vector<8x128xf32>
    tpu.vector_store %arg4[%c0_9, %c0_10], %18 {strides = array<i32>} : memref<8x128xf32, #tpu.memory_space<vmem>>, vector<8x128xf32>,
    return
  }
  func.func @transform_0(%arg0: i32, %arg1: i32) -> (i32, i32) {
    %c0_i32 = arith.constant 0 : i32
    return %arg0, %arg1 : i32, i32
  }
  func.func @transform_1(%arg0: i32, %arg1: i32) -> (i32, i32) {
    %c0_i32 = arith.constant 0 : i32
    %c0_i32_0 = arith.constant 0 : i32
    return %arg0, %c0_i32 : i32, i32
  }
  func.func @transform_2(%arg0: i32, %arg1: i32) -> (i32, i32) {
    %c0_i32 = arith.constant 0 : i32
    %c0_i32_0 = arith.constant 0 : i32
    return %arg0, %c0_i32 : i32, i32
  }
}

</mosaic_0001>

<llo_original>
// kernel: tpu_custom_call.1
$region0: #{tpu_custom_call.1}
  #allocation0 [shape = 'u32[]', space=smem, size = 0x4, offset = 0x4, fixed_abs, tag = 'smem constant byte address 0x4 - core index']
  #allocation1 [shape = 'u32[144,128]{1,0:T(1,128)}', space=vmem, size = 0x12000, scoped, tag = 'internal scratch']
  %s0 = inlined_call_operand.hbm [shape: f32[8,256], index: 0, kind: input, shape index: {}]
  %s1 = inlined_call_operand.hbm [shape: f32[8,128], index: 1, kind: output, shape index: {0}]
  %s2 = inlined_call_operand.hbm [shape: f32[8,128], index: 2, kind: output, shape index: {1}]
  %3 = xla_tuple %s1, %s2
  %s4 = sld [smem:[#allocation0]]
  $region30: #{tpu_custom_call.1} parent=0
    _
  %s6 = ssub.s32 1, %s4
  %s7 = scalar_select 0, %s6, %s4
  $region1: #{tpu_custom_call.1} parent=0
    #allocation2 [shape = 'u8[8192]{0}', space=vmem, size = 0x2000, scoped, tag = 'input window, operand 0, single buffered']
    #allocation3 [shape = 's32[1]{0}', space=sflag, size = 0x4, scoped, tag = 'scoped memory for tpu_custom_call.1']
    #allocation4 [shape = 's32[1]{0}', space=sflag, size = 0x4, scoped, tag = 'scoped memory for tpu_custom_call.1']
    #allocation5 [shape = 'u8[4096]{0}', space=vmem, size = 0x1000, scoped, tag = 'output window, operand 0, single buffered']
    #allocation6 [shape = 'u8[4096]{0}', space=vmem, size = 0x1000, scoped, tag = 'output window, operand 1, single buffered']
    #allocation7 [shape = 's32[1]{0}', space=sflag, size = 0x4, scoped, tag = 'scoped memory for tpu_custom_call.1']
    %8 = vsyncpa [#allocation3], 0
    %9 = vsyncpa [#allocation4], 0
    %10 = vsyncpa [#allocation7], 0
    // Predicated region
    $region2: #{tpu_custom_call.1} parent=1 // pred_check
      _
    $region3: #{tpu_custom_call.1} parent=1 // pred_check_branch
      %12 = sbr.rel (0) target = $region5
    $region4: #{tpu_custom_call.1} parent=1 // pred_region
      %s14 = ssub.s32 256, 256
      %15 = vsyncadd [#allocation3], %s14
      %s17 = sshll.u32 [#allocation2], 4
      %s18 = int_to_ptr.vmem [resolvable:$true] %s17
      %20 = dma.hbm_to_vmem [thread:$0]  %s0, 256, %s18, [#allocation3]
    $region5: #{tpu_custom_call.1} parent=1 // pred_fallthru
      _
    // Predicated region
    $region6: #{tpu_custom_call.1} parent=1 // pred_check
      _
    $region7: #{tpu_custom_call.1} parent=1 // pred_check_branch
      %22 = sbr.rel (0) target = $region9
    $region8: #{tpu_custom_call.1} parent=1 // pred_region
      %23 = dma.done [#allocation3], 256
    $region9: #{tpu_custom_call.1} parent=1 // pred_fallthru
      _
    %p24 = scmp.eq.s32.totalorder 0, 0
    // Predicated region
    $region10: #{tpu_custom_call.1} parent=1 // pred_check
      %p25 = pneg %p24
    $region11: #{tpu_custom_call.1} parent=1 // pred_check_branch
      %27 = sbr.rel (%p25) target = $region13
    $region12: #{tpu_custom_call.1} parent=1 // pred_region
      %28 = vst [vmem:[#allocation5] sm:$0xff] 0.0
      %29 = vst [vmem:[#allocation6] sm:$0xff] 0.0
    $region13: #{tpu_custom_call.1} parent=1 // pred_fallthru
      _
    %v30 = vld [vmem:[#allocation2] sm:$0xff]
    %v31 = vld [vmem:[#allocation2 + $0x8] sm:$0xff]
    %v32 = vadd.f32 %v30, 0.0
    %v33 = vmul.f32 %v30, %v30
    %v34 = vadd.f32 %v33, 0.0
    %v35 = vadd.f32 %v32, %v31
    %v36 = vmul.f32 %v31, %v31
    %v37 = vadd.f32 %v34, %v36
    %v38 = vld [vmem:[#allocation5] sm:$0xff]
    %v39 = vadd.f32 %v38, %v35
    %40 = vst [vmem:[#allocation5] sm:$0xff] %v39
    %v41 = vld [vmem:[#allocation6] sm:$0xff]
    %v42 = vadd.f32 %v41, %v37
    %43 = vst [vmem:[#allocation6] sm:$0xff] %v42
    // Predicated region
    $region14: #{tpu_custom_call.1} parent=1 // pred_check
      _
    $region15: #{tpu_custom_call.1} parent=1 // pred_check_branch
      %45 = sbr.rel (0) target = $region17
    $region16: #{tpu_custom_call.1} parent=1 // pred_region
      %s47 = ssub.s32 128, 128
      %48 = vsyncadd [#allocation4], %s47
      %s50 = sshll.u32 [#allocation5], 4
      %s51 = int_to_ptr.vmem [resolvable:$true] %s50
      %53 = dma.vmem_to_hbm [thread:$0]  %s51, 128, %s1, [#allocation4]
    $region17: #{tpu_custom_call.1} parent=1 // pred_fallthru
      _
    // Predicated region
    $region18: #{tpu_custom_call.1} parent=1 // pred_check
      _
    $region19: #{tpu_custom_call.1} parent=1 // pred_check_branch
      %55 = sbr.rel (0) target = $region21
    $region20: #{tpu_custom_call.1} parent=1 // pred_region
      %s57 = ssub.s32 128, 128
      %58 = vsyncadd [#allocation7], %s57
      %s60 = sshll.u32 [#allocation6], 4
      %s61 = int_to_ptr.vmem [resolvable:$true] %s60
      %63 = dma.vmem_to_hbm [thread:$0]  %s61, 128, %s2, [#allocation7]
    $region21: #{tpu_custom_call.1} parent=1 // pred_fallthru
      _
    // Predicated region
    $region22: #{tpu_custom_call.1} parent=1 // pred_check
      _
    $region23: #{tpu_custom_call.1} parent=1 // pred_check_branch
      %65 = sbr.rel (0) target = $region25
    $region24: #{tpu_custom_call.1} parent=1 // pred_region
      %66 = dma.done [#allocation4], 128
    $region25: #{tpu_custom_call.1} parent=1 // pred_fallthru
      _
    // Predicated region
    $region26: #{tpu_custom_call.1} parent=1 // pred_check
      _
    $region27: #{tpu_custom_call.1} parent=1 // pred_check_branch
      %68 = sbr.rel (0) target = $region29
    $region28: #{tpu_custom_call.1} parent=1 // pred_region
      %69 = dma.done [#allocation7], 128
    $region29: #{tpu_custom_call.1} parent=1 // pred_fallthru
      _
    %70 = vsyncpa [#allocation3], 1
    %71 = vsyncpa [#allocation4], 1
    %72 = vsyncpa [#allocation7], 1

</llo_original>
